<compile_context>
chip_gen: v5e
topology: v5e:2x2
jax: 0.10.0
libtpu: 0.0.40
codegen_flags: <defaults>
</compile_context>

<pallas_src>
import functools

import jax
import jax.numpy as jnp
from jax.experimental import pallas as pl
from jax.experimental.pallas import tpu as pltpu

LANE = 128     # TPU lane width  (last dim alignment)
SUBLANE = 8    # TPU sublane width (second-to-last dim alignment)


def _round_up(x: int, m: int) -> int:
    return (x + m - 1) // m * m


def _pad2d(a, rows: int, cols: int):
    r, c = a.shape
    return jnp.pad(a, ((0, rows - r), (0, cols - c)))


def autoencoder_kernel(x_ref,
                       w1_ref, b1_ref,
                       w23_ref, b23_ref,
                       w4_ref, b4_ref,
                       out_ref):
    """Fused autoencoder forward for one batch tile.

    All feature dims are padded to multiples of 128; padding lanes carry
    zeros all the way through (zero weights / zero biases), so they do not
    perturb the valid lanes.
    """
    x = x_ref[...]

    # ---- encoder layer 1 + ReLU ----
    h1 = jnp.dot(x, w1_ref[...], preferred_element_type=jnp.float32) + b1_ref[...]
    h1 = jnp.maximum(h1, 0.0)

    # ---- encoder layer 2 + decoder layer 1 fused (no nonlinearity between
    #      them):  relu((h1 @ w2 + b2) @ w3 + b3) == relu(h1 @ (w2@w3) + (b2@w3 + b3))
    h2 = jnp.dot(h1, w23_ref[...], preferred_element_type=jnp.float32) + b23_ref[...]
    h2 = jnp.maximum(h2, 0.0)

    # ---- decoder layer 2 ----
    x_recon = jnp.dot(h2, w4_ref[...], preferred_element_type=jnp.float32) + b4_ref[...]

    out_ref[...] = x_recon.astype(out_ref.dtype)


@functools.partial(jax.jit, static_argnames=("tile_b",))
def autoencoder_forward(x, params, tile_b: int = 256):
    """Autoencoder forward pass via a gridded Pallas kernel.

    x:      (batch, input_dim) float32
    params: dict with w1..w4 stored as (in_features, out_features) and
            b1..b4 stored as (1, out_features), float32.
    """
    batch, input_dim = x.shape
    hidden = params["w1"].shape[1]

    # ---- lane-dense padded sizes ----
    d_pad = _round_up(input_dim, LANE)   # input / output feature dim
    h_pad = _round_up(hidden, LANE)      # hidden dim (64 -> 128)

    # ---- batch tiling ----
    tile_b = max(SUBLANE, min(tile_b, _round_up(batch, SUBLANE)))
    batch_pad = _round_up(batch, tile_b)
    n_tiles = batch_pad // tile_b

    # ---- algebraic fusion of the two middle linears (exact up to f32 rounding) ----
    w23 = jnp.dot(params["w2"], params["w3"], precision=jax.lax.Precision.HIGHEST)
    b23 = jnp.dot(params["b2"], params["w3"], precision=jax.lax.Precision.HIGHEST) + params["b3"]

    # ---- zero-pad operands to aligned shapes ----
    x_p  = _pad2d(x, batch_pad, d_pad)
    w1_p = _pad2d(params["w1"], d_pad, h_pad)
    b1_p = _pad2d(params["b1"], 1, h_pad)
    w23_p = _pad2d(w23, h_pad, h_pad)
    b23_p = _pad2d(b23, 1, h_pad)
    w4_p = _pad2d(params["w4"], h_pad, d_pad)
    b4_p = _pad2d(params["b4"], 1, d_pad)

    # ---- BlockSpecs: x/out tiled over batch, weights/biases resident ----
    def batch_map(i):
        return (i, 0)

    def resident_map(i):
        return (0, 0)

    in_specs = [
        pl.BlockSpec((tile_b, d_pad), batch_map),       # x
        pl.BlockSpec((d_pad, h_pad), resident_map),     # w1
        pl.BlockSpec((1, h_pad), resident_map),         # b1
        pl.BlockSpec((h_pad, h_pad), resident_map),     # w23
        pl.BlockSpec((1, h_pad), resident_map),         # b23
        pl.BlockSpec((h_pad, d_pad), resident_map),     # w4
        pl.BlockSpec((1, d_pad), resident_map),         # b4
    ]
    out_specs = pl.BlockSpec((tile_b, d_pad), batch_map)

    # ---- advisory cost estimate (helps XLA schedule around the call) ----
    flops = 2 * batch_pad * (d_pad * h_pad + h_pad * h_pad + h_pad * d_pad)
    weight_bytes = 4 * (d_pad * h_pad + h_pad * h_pad + h_pad * d_pad + 3 * h_pad + d_pad)
    bytes_accessed = 4 * (2 * batch_pad * d_pad) + weight_bytes
    cost = pl.CostEstimate(flops=flops, transcendentals=0,
                           bytes_accessed=bytes_accessed)

    out_p = pl.pallas_call(
        autoencoder_kernel,
        out_shape=jax.ShapeDtypeStruct((batch_pad, d_pad), jnp.float32),
        grid=(n_tiles,),
        in_specs=in_specs,
        out_specs=out_specs,
        compiler_params=pltpu.CompilerParams(
            dimension_semantics=("parallel",)),
        cost_estimate=cost,
    )(x_p, w1_p, b1_p, w23_p, b23_p, w4_p, b4_p)

    # Slice away batch / lane padding.
    return out_p[:batch, :input_dim]


def init_params(key, input_dim, latent_dim=10, hidden=64):
    """PyTorch nn.Linear default init: U[-1/sqrt(fan_in), 1/sqrt(fan_in)].

    Weights stored as (in_features, out_features) so the kernel does x @ W;
    biases stored as (1, out_features).
    """
    dims = [(input_dim, hidden), (hidden, latent_dim),
            (latent_dim, hidden), (hidden, input_dim)]
    params = {}
    for i, (fan_in, fan_out) in enumerate(dims, start=1):
        key, kw, kb = jax.random.split(key, 3)
        bound = 1.0 / jnp.sqrt(jnp.float32(fan_in))
        params[f"w{i}"] = jax.random.uniform(
            kw, (fan_in, fan_out), jnp.float32, minval=-bound, maxval=bound)
        params[f"b{i}"] = jax.random.uniform(
            kb, (1, fan_out), jnp.float32, minval=-bound, maxval=bound)
    return params


def reference_forward(x, params):
    """Plain-JAX reference of the unfused 4-layer forward pass."""
    h1 = jnp.maximum(x @ params["w1"] + params["b1"], 0.0)
    z = h1 @ params["w2"] + params["b2"]
    h2 = jnp.maximum(z @ params["w3"] + params["b3"], 0.0)
    return h2 @ params["w4"] + params["b4"]


if __name__ == "__main__":
    key = jax.random.PRNGKey(0)
    key, kx = jax.random.split(key)

    batch, input_dim, latent_dim = 8, 32, 10
    x = jax.random.normal(kx, (batch, input_dim), jnp.float32)
    params = init_params(key, input_dim, latent_dim)

    out = autoencoder_forward(x, params)
    out = jax.block_until_ready(out)

    ref = reference_forward(x, params)
    assert out.shape == (batch, input_dim)
    # Tolerance slightly relaxed vs bit-exact because the two middle linears
    # are fused algebraically (reassociated f32 accumulation).
    assert jnp.allclose(out, ref, atol=1e-4, rtol=1e-4), "mismatch vs reference"

    # TODO(synk): fit()/transform() (Adam training loop, DataLoader, pandas I/O)
    # are host-side training utilities with no Pallas equivalent; only forward
    # is implemented.

    print("KERNEL_OK")
</pallas_src>

<mosaic_0001>
module attributes {stable_mosaic.version = 11 : i64} {
  func.func @autoencoder_kernel(%arg0: i32, %arg1: memref<8x128xf32, #tpu.memory_space<vmem>>, %arg2: memref<128x128xf32, #tpu.memory_space<vmem>>, %arg3: memref<1x128xf32, #tpu.memory_space<vmem>>, %arg4: memref<128x128xf32, #tpu.memory_space<vmem>>, %arg5: memref<1x128xf32, #tpu.memory_space<vmem>>, %arg6: memref<128x128xf32, #tpu.memory_space<vmem>>, %arg7: memref<1x128xf32, #tpu.memory_space<vmem>>, %arg8: memref<8x128xf32, #tpu.memory_space<vmem>>) attributes {dimension_semantics = [#tpu.dimension_semantics<parallel>], iteration_bounds = array<i64: 1>, scalar_prefetch = 0 : i64, scratch_operands = 0 : i64, tpu.core_type = #tpu.core_type<tc>, window_params = [{transform_indices = @transform_0, window_bounds = array<i64: 8, 128>}, {pipeline_mode = #tpu.pipeline_mode<synchronous>, transform_indices = @transform_1, window_bounds = array<i64: 128, 128>}, {pipeline_mode = #tpu.pipeline_mode<synchronous>, transform_indices = @transform_2, window_bounds = array<i64: 1, 128>}, {pipeline_mode = #tpu.pipeline_mode<synchronous>, transform_indices = @transform_3, window_bounds = array<i64: 128, 128>}, {pipeline_mode = #tpu.pipeline_mode<synchronous>, transform_indices = @transform_4, window_bounds = array<i64: 1, 128>}, {pipeline_mode = #tpu.pipeline_mode<synchronous>, transform_indices = @transform_5, window_bounds = array<i64: 128, 128>}, {pipeline_mode = #tpu.pipeline_mode<synchronous>, transform_indices = @transform_6, window_bounds = array<i64: 1, 128>}, {transform_indices = @transform_7, window_bounds = array<i64: 8, 128>}]} {
    %c0 = arith.constant 0 : index
    %c0_0 = arith.constant 0 : index
    %0 = vector.load %arg1[%c0, %c0_0] : memref<8x128xf32, #tpu.memory_space<vmem>>, vector<8x128xf32>
    %c0_1 = arith.constant 0 : index
    %c0_2 = arith.constant 0 : index
    %1 = vector.load %arg2[%c0_1, %c0_2] : memref<128x128xf32, #tpu.memory_space<vmem>>, vector<128x128xf32>
    %cst = arith.constant dense<0.000000e+00> : vector<8x128xf32>
    %2 = tpu.matmul %0, %1, %cst {dimension_numbers = #tpu.dot_dimension_numbers<[1], [0], [0], [1], [0, 0, 1, 1], [], []>} : vector<8x128xf32>, vector<128x128xf32>, vector<8x128xf32> -> vector<8x128xf32>
    %c0_3 = arith.constant 0 : index
    %c0_4 = arith.constant 0 : index
    %3 = vector.load %arg3[%c0_3, %c0_4] : memref<1x128xf32, #tpu.memory_space<vmem>>, vector<1x128xf32>
    %4 = vector.broadcast %3 : vector<1x128xf32> to vector<8x128xf32>
    %5 = arith.addf %2, %4 : vector<8x128xf32>
    %cst_5 = arith.constant 0.000000e+00 : f32
    %6 = vector.broadcast %cst_5 : f32 to vector<8x128xf32>
    %7 = arith.maximumf %5, %6 : vector<8x128xf32>
    %c0_6 = arith.constant 0 : index
    %c0_7 = arith.constant 0 : index
    %8 = vector.load %arg4[%c0_6, %c0_7] : memref<128x128xf32, #tpu.memory_space<vmem>>, vector<128x128xf32>
    %cst_8 = arith.constant dense<0.000000e+00> : vector<8x128xf32>
    %9 = tpu.matmul %7, %8, %cst_8 {dimension_numbers = #tpu.dot_dimension_numbers<[1], [0], [0], [1], [0, 0, 1, 1], [], []>} : vector<8x128xf32>, vector<128x128xf32>, vector<8x128xf32> -> vector<8x128xf32>
    %c0_9 = arith.constant 0 : index
    %c0_10 = arith.constant 0 : index
    %10 = vector.load %arg5[%c0_9, %c0_10] : memref<1x128xf32, #tpu.memory_space<vmem>>, vector<1x128xf32>
    %11 = vector.broadcast %10 : vector<1x128xf32> to vector<8x128xf32>
    %12 = arith.addf %9, %11 : vector<8x128xf32>
    %cst_11 = arith.constant 0.000000e+00 : f32
    %13 = vector.broadcast %cst_11 : f32 to vector<8x128xf32>
    %14 = arith.maximumf %12, %13 : vector<8x128xf32>
    %c0_12 = arith.constant 0 : index
    %c0_13 = arith.constant 0 : index
    %15 = vector.load %arg6[%c0_12, %c0_13] : memref<128x128xf32, #tpu.memory_space<vmem>>, vector<128x128xf32>
    %cst_14 = arith.constant dense<0.000000e+00> : vector<8x128xf32>
    %16 = tpu.matmul %14, %15, %cst_14 {dimension_numbers = #tpu.dot_dimension_numbers<[1], [0], [0], [1], [0, 0, 1, 1], [], []>} : vector<8x128xf32>, vector<128x128xf32>, vector<8x128xf32> -> vector<8x128xf32>
    %c0_15 = arith.constant 0 : index
    %c0_16 = arith.constant 0 : index
    %17 = vector.load %arg7[%c0_15, %c0_16] : memref<1x128xf32, #tpu.memory_space<vmem>>, vector<1x128xf32>
    %18 = vector.broadcast %17 : vector<1x128xf32> to vector<8x128xf32>
    %19 = arith.addf %16, %18 : vector<8x128xf32>
    %c0_17 = arith.constant 0 : index
    %c0_18 = arith.constant 0 : index
    %20 = vector.load %arg8[%c0_17, %c0_18] : memref<8x128xf32, #tpu.memory_space<vmem>>, vector<8x128xf32>
    tpu.vector_store %arg8[%c0_17, %c0_18], %19 {strides = array<i32>} : memref<8x128xf32, #tpu.memory_space<vmem>>, vector<8x128xf32>,
    return
  }
  func.func @transform_0(%arg0: i32) -> (i32, i32) {
    %c0_i32 = arith.constant 0 : i32
    %c0_i32_0 = arith.constant 0 : i32
    return %arg0, %c0_i32 : i32, i32
  }
  func.func @transform_1(%arg0: i32) -> (i32, i32) {
    %c0_i32 = arith.constant 0 : i32
    %c0_i32_0 = arith.constant 0 : i32
    %c0_i32_1 = arith.constant 0 : i32
    return %c0_i32, %c0_i32_0 : i32, i32
  }
  func.func @transform_2(%arg0: i32) -> (i32, i32) {
    %c0_i32 = arith.constant 0 : i32
    %c0_i32_0 = arith.constant 0 : i32
    %c0_i32_1 = arith.constant 0 : i32
    return %c0_i32, %c0_i32_0 : i32, i32
  }
  func.func @transform_3(%arg0: i32) -> (i32, i32) {
    %c0_i32 = arith.constant 0 : i32
    %c0_i32_0 = arith.constant 0 : i32
    %c0_i32_1 = arith.constant 0 : i32
    return %c0_i32, %c0_i32_0 : i32, i32
  }
  func.func @transform_4(%arg0: i32) -> (i32, i32) {
    %c0_i32 = arith.constant 0 : i32
    %c0_i32_0 = arith.constant 0 : i32
    %c0_i32_1 = arith.constant 0 : i32
    return %c0_i32, %c0_i32_0 : i32, i32
  }
  func.func @transform_5(%arg0: i32) -> (i32, i32) {
    %c0_i32 = arith.constant 0 : i32
    %c0_i32_0 = arith.constant 0 : i32
    %c0_i32_1 = arith.constant 0 : i32
    return %c0_i32, %c0_i32_0 : i32, i32
  }
  func.func @transform_6(%arg0: i32) -> (i32, i32) {
    %c0_i32 = arith.constant 0 : i32
    %c0_i32_0 = arith.constant 0 : i32
    %c0_i32_1 = arith.constant 0 : i32
    return %c0_i32, %c0_i32_0 : i32, i32
  }
  func.func @transform_7(%arg0: i32) -> (i32, i32) {
    %c0_i32 = arith.constant 0 : i32
    %c0_i32_0 = arith.constant 0 : i32
    return %arg0, %c0_i32 : i32, i32
  }
}

</mosaic_0001>

<llo_original>
// kernel: autoencoder_forward.1
$region0: #{autoencoder_forward.1}
  #allocation0 [shape = 'u32[]', space=smem, size = 0x4, offset = 0x4, fixed_abs, tag = 'smem constant byte address 0x4 - core index']
  #allocation1 [shape = 'u32[72,128]{1,0:T(1,128)}', space=vmem, size = 0x9000, scoped, tag = 'internal scratch']
  %s0 = inlined_call_operand.vmem [shape: f32[8,128], index: 0, kind: input, shape index: {}]
  %s1 = inlined_call_operand.vmem [shape: f32[128,128], index: 1, kind: input, shape index: {}]
  %s2 = inlined_call_operand.vmem [shape: f32[1,128], index: 2, kind: input, shape index: {}]
  %s3 = inlined_call_operand.vmem [shape: f32[128,128], index: 3, kind: input, shape index: {}]
  %s4 = inlined_call_operand.vmem [shape: f32[1,128], index: 4, kind: input, shape index: {}]
  %s5 = inlined_call_operand.vmem [shape: f32[128,128], index: 5, kind: input, shape index: {}]
  %s6 = inlined_call_operand.vmem [shape: f32[1,128], index: 6, kind: input, shape index: {}]
  %s7 = inlined_call_operand.hbm [shape: f32[8,128], index: 7, kind: output, shape index: {}]
  %s8 = sld [smem:[#allocation0]]
  $region38: #{autoencoder_forward.1} parent=0
    _
  %s10 = ssub.s32 1, %s8
  %s11 = scalar_select 0, %s10, %s8
  $region1: #{autoencoder_forward.1} parent=0
    #allocation2 [shape = 'u8[4096]{0}', space=vmem, size = 0x1000, scoped, tag = 'output window, operand 0, single buffered']
    #allocation3 [shape = 's32[1]{0}', space=sflag, size = 0x4, scoped, tag = 'scoped memory for autoencoder_forward.1']
    %12 = vsyncpa [#allocation3], 0
    // Predicated region
    $region2: #{autoencoder_forward.1} parent=1 // pred_check
      _
    $region3: #{autoencoder_forward.1} parent=1 // pred_check_branch
      %14 = sbr.rel (0) target = $region5
    $region4: #{autoencoder_forward.1} parent=1 // pred_region
      _
    $region5: #{autoencoder_forward.1} parent=1 // pred_fallthru
      _
    // Predicated region
    $region6: #{autoencoder_forward.1} parent=1 // pred_check
      _
    $region7: #{autoencoder_forward.1} parent=1 // pred_check_branch
      %16 = sbr.rel (0) target = $region9
    $region8: #{autoencoder_forward.1} parent=1 // pred_region
      _
    $region9: #{autoencoder_forward.1} parent=1 // pred_fallthru
      _
    // Predicated region
    $region10: #{autoencoder_forward.1} parent=1 // pred_check
      _
    $region11: #{autoencoder_forward.1} parent=1 // pred_check_branch
      %18 = sbr.rel (0) target = $region13
    $region12: #{autoencoder_forward.1} parent=1 // pred_region
      _
    $region13: #{autoencoder_forward.1} parent=1 // pred_fallthru
      _
    // Predicated region
    $region14: #{autoencoder_forward.1} parent=1 // pred_check
      _
    $region15: #{autoencoder_forward.1} parent=1 // pred_check_branch
      %20 = sbr.rel (0) target = $region17
    $region16: #{autoencoder_forward.1} parent=1 // pred_region
      _
    $region17: #{autoencoder_forward.1} parent=1 // pred_fallthru
      _
    // Predicated region
    $region18: #{autoencoder_forward.1} parent=1 // pred_check
      _
    $region19: #{autoencoder_forward.1} parent=1 // pred_check_branch
      %22 = sbr.rel (0) target = $region21
    $region20: #{autoencoder_forward.1} parent=1 // pred_region
      _
    $region21: #{autoencoder_forward.1} parent=1 // pred_fallthru
      _
    // Predicated region
    $region22: #{autoencoder_forward.1} parent=1 // pred_check
      _
    $region23: #{autoencoder_forward.1} parent=1 // pred_check_branch
      %24 = sbr.rel (0) target = $region25
    $region24: #{autoencoder_forward.1} parent=1 // pred_region
      _
    $region25: #{autoencoder_forward.1} parent=1 // pred_fallthru
      _
    // Predicated region
    $region26: #{autoencoder_forward.1} parent=1 // pred_check
      _
    $region27: #{autoencoder_forward.1} parent=1 // pred_check_branch
      %26 = sbr.rel (0) target = $region29
    $region28: #{autoencoder_forward.1} parent=1 // pred_region
      _
    $region29: #{autoencoder_forward.1} parent=1 // pred_fallthru
      _
    %v27 = vld [vmem:[%s0] sm:$0xff]
    %v28 = vld [vmem:[%s1] sm:$0xff]
    %v29 = vld [vmem:[%s1 + $0x8] sm:$0xff]
    %v30 = vld [vmem:[%s1 + $0x10] sm:$0xff]
    %v31 = vld [vmem:[%s1 + $0x18] sm:$0xff]
    %v32 = vld [vmem:[%s1 + $0x20] sm:$0xff]
    %v33 = vld [vmem:[%s1 + $0x28] sm:$0xff]
    %v34 = vld [vmem:[%s1 + $0x30] sm:$0xff]
    %v35 = vld [vmem:[%s1 + $0x38] sm:$0xff]
    %v36 = vld [vmem:[%s1 + $0x40] sm:$0xff]
    %v37 = vld [vmem:[%s1 + $0x48] sm:$0xff]
    %v38 = vld [vmem:[%s1 + $0x50] sm:$0xff]
    %v39 = vld [vmem:[%s1 + $0x58] sm:$0xff]
    %v40 = vld [vmem:[%s1 + $0x60] sm:$0xff]
    %v41 = vld [vmem:[%s1 + $0x68] sm:$0xff]
    %v42 = vld [vmem:[%s1 + $0x70] sm:$0xff]
    %v43 = vld [vmem:[%s1 + $0x78] sm:$0xff]
    %v44 = vld [vmem:[%s2] sm:$0x1]
    %v46 = vperm.slane %v44, 0
    %48 = vmatpush.msra.mxu0 %v43
    %49 = vmatpush.msra.mxu0 %v42
    %50 = vmatpush.msra.mxu0 %v41
    %51 = vmatpush.msra.mxu0 %v40
    %52 = vmatpush.msra.mxu0 %v39
    %53 = vmatpush.msra.mxu0 %v38
    %54 = vmatpush.msra.mxu0 %v37
    %55 = vmatpush.msra.mxu0 %v36
    %56 = vmatpush.msra.mxu0 %v35
    %57 = vmatpush.msra.mxu0 %v34
    %58 = vmatpush.msra.mxu0 %v33
    %59 = vmatpush.msra.mxu0 %v32
    %60 = vmatpush.msra.mxu0 %v31
    %61 = vmatpush.msra.mxu0 %v30
    %62 = vmatpush.msra.mxu0 %v29
    %63 = vmatpush.msra.mxu0 %v28
    %64 = vmatmul.f32.gmra.mxu0 %v27
    %v65 = vpop.f32.mrf.mxu0
    %v66 = vadd.f32 %v46, %v65
    %67 = vdwg.mxu0
    %v68 = vmax.f32 %v66, 0.0
    %v69 = vld [vmem:[%s3] sm:$0xff]
    %v70 = vld [vmem:[%s3 + $0x8] sm:$0xff]
    %v71 = vld [vmem:[%s3 + $0x10] sm:$0xff]
    %v72 = vld [vmem:[%s3 + $0x18] sm:$0xff]
    %v73 = vld [vmem:[%s3 + $0x20] sm:$0xff]
    %v74 = vld [vmem:[%s3 + $0x28] sm:$0xff]
    %v75 = vld [vmem:[%s3 + $0x30] sm:$0xff]
    %v76 = vld [vmem:[%s3 + $0x38] sm:$0xff]
    %v77 = vld [vmem:[%s3 + $0x40] sm:$0xff]
    %v78 = vld [vmem:[%s3 + $0x48] sm:$0xff]
    %v79 = vld [vmem:[%s3 + $0x50] sm:$0xff]
    %v80 = vld [vmem:[%s3 + $0x58] sm:$0xff]
    %v81 = vld [vmem:[%s3 + $0x60] sm:$0xff]
    %v82 = vld [vmem:[%s3 + $0x68] sm:$0xff]
    %v83 = vld [vmem:[%s3 + $0x70] sm:$0xff]
    %v84 = vld [vmem:[%s3 + $0x78] sm:$0xff]
    %v85 = vld [vmem:[%s4] sm:$0x1]
    %v87 = vperm.slane %v85, 0
    %89 = vmatpush.msra.mxu0 %v84
    %90 = vmatpush.msra.mxu0 %v83
    %91 = vmatpush.msra.mxu0 %v82
    %92 = vmatpush.msra.mxu0 %v81
    %93 = vmatpush.msra.mxu0 %v80
    %94 = vmatpush.msra.mxu0 %v79
    %95 = vmatpush.msra.mxu0 %v78
    %96 = vmatpush.msra.mxu0 %v77
    %97 = vmatpush.msra.mxu0 %v76
    %98 = vmatpush.msra.mxu0 %v75
    %99 = vmatpush.msra.mxu0 %v74
    %100 = vmatpush.msra.mxu0 %v73
    %101 = vmatpush.msra.mxu0 %v72
    %102 = vmatpush.msra.mxu0 %v71
    %103 = vmatpush.msra.mxu0 %v70
    %104 = vmatpush.msra.mxu0 %v69
    %105 = vmatmul.f32.gmra.mxu0 %v68
    %v106 = vpop.f32.mrf.mxu0
    %v107 = vadd.f32 %v87, %v106
    %108 = vdwg.mxu0
    %v109 = vmax.f32 %v107, 0.0
    %v110 = vld [vmem:[%s5] sm:$0xff]
    %v111 = vld [vmem:[%s5 + $0x8] sm:$0xff]
    %v112 = vld [vmem:[%s5 + $0x10] sm:$0xff]
    %v113 = vld [vmem:[%s5 + $0x18] sm:$0xff]
    %v114 = vld [vmem:[%s5 + $0x20] sm:$0xff]
    %v115 = vld [vmem:[%s5 + $0x28] sm:$0xff]
    %v116 = vld [vmem:[%s5 + $0x30] sm:$0xff]
    %v117 = vld [vmem:[%s5 + $0x38] sm:$0xff]
    %v118 = vld [vmem:[%s5 + $0x40] sm:$0xff]
    %v119 = vld [vmem:[%s5 + $0x48] sm:$0xff]
    %v120 = vld [vmem:[%s5 + $0x50] sm:$0xff]
    %v121 = vld [vmem:[%s5 + $0x58] sm:$0xff]
    %v122 = vld [vmem:[%s5 + $0x60] sm:$0xff]
    %v123 = vld [vmem:[%s5 + $0x68] sm:$0xff]
    %v124 = vld [vmem:[%s5 + $0x70] sm:$0xff]
    %v125 = vld [vmem:[%s5 + $0x78] sm:$0xff]
    %v126 = vld [vmem:[%s6] sm:$0x1]
    %v128 = vperm.slane %v126, 0
    %130 = vmatpush.msra.mxu0 %v125
    %131 = vmatpush.msra.mxu0 %v124
    %132 = vmatpush.msra.mxu0 %v123
    %133 = vmatpush.msra.mxu0 %v122
    %134 = vmatpush.msra.mxu0 %v121
    %135 = vmatpush.msra.mxu0 %v120
    %136 = vmatpush.msra.mxu0 %v119
    %137 = vmatpush.msra.mxu0 %v118
    %138 = vmatpush.msra.mxu0 %v117
    %139 = vmatpush.msra.mxu0 %v116
    %140 = vmatpush.msra.mxu0 %v115
    %141 = vmatpush.msra.mxu0 %v114
    %142 = vmatpush.msra.mxu0 %v113
    %143 = vmatpush.msra.mxu0 %v112
    %144 = vmatpush.msra.mxu0 %v111
    %145 = vmatpush.msra.mxu0 %v110
    %146 = vmatmul.f32.gmra.mxu0 %v109
    %v147 = vpop.f32.mrf.mxu0
    %v148 = vadd.f32 %v128, %v147
    %149 = vdwg.mxu0
    %150 = vst [vmem:[#allocation2] sm:$0xff] %v148
    // Predicated region
    $region30: #{autoencoder_forward.1} parent=1 // pred_check
      _
    $region31: #{autoencoder_forward.1} parent=1 // pred_check_branch
      %152 = sbr.rel (0) target = $region33
    $region32: #{autoencoder_forward.1} parent=1 // pred_region
      %154 = vsyncadd [#allocation3], 0
      %s156 = sshll.u32 [#allocation2], 4
      %s157 = int_to_ptr.vmem [resolvable:$true] %s156
      %s158 = sshll.u32 %s7, 4
      %s159 = int_to_ptr.hbm [resolvable:$true] %s158
      %161 = dma.vmem_to_hbm [thread:$0]  %s157, 128, %s159, [#allocation3]
    $region33: #{autoencoder_forward.1} parent=1 // pred_fallthru
      _
    // Predicated region
    $region34: #{autoencoder_forward.1} parent=1 // pred_check
      _
    $region35: #{autoencoder_forward.1} parent=1 // pred_check_branch
      %163 = sbr.rel (0) target = $region37
    $region36: #{autoencoder_forward.1} parent=1 // pred_region
      %165 = dma.done [#allocation3], 128
    $region37: #{autoencoder_forward.1} parent=1 // pred_fallthru
      _
    %166 = vsyncpa [#allocation3], 1

</llo_original>
